<compile_context>
chip_gen: v7x
topology: tpu7x:2x2x1
jax: 0.10.0
libtpu: 0.0.40
codegen_flags: <defaults>
</compile_context>

<pallas_src>
import jax
import jax.numpy as jnp
from jax.experimental import pallas as pl
from jax.experimental.pallas import tpu as pltpu


def _round_up(x, m):
    return ((x + m - 1) // m) * m


def _ids_mlp_kernel(x_ref, w1_ref, b1_ref, w2_ref, b2_ref, w3_ref, b3_ref, o_ref):
    # x_ref: (TB, D) bf16   w1: (D, 64) bf16   b1: (1, 64) f32
    # w2: (64, 32) bf16     b2: (1, 32) f32
    # w3: (32, 1)  f32      b3: (1, 1)  f32    o_ref: (1, TB) f32
    x = x_ref[...]                                                   # (TB, D) bf16

    # Layer 1: Linear(D, 64) + ReLU  (bf16 MXU feed, f32 accumulation)
    h1 = jnp.dot(x, w1_ref[...], preferred_element_type=jnp.float32)
    h1 = jnp.maximum(h1 + b1_ref[...], 0.0)                          # (TB, 64) f32

    # Layer 2: Linear(64, 32) + ReLU
    h2 = jnp.dot(h1.astype(jnp.bfloat16), w2_ref[...],
                 preferred_element_type=jnp.float32)
    h2 = jnp.maximum(h2 + b2_ref[...], 0.0)                          # (TB, 32) f32

    # Layer 3: Linear(32, 1) + Sigmoid, computed transposed so the batch dim
    # lands on lanes (lane-dense output, no degenerate N=1 matmul / no masked
    # partial stores).
    h2t = h2.T                                                       # (32, TB) f32 (XLU)
    logits_t = jnp.sum(h2t * w3_ref[...], axis=0, keepdims=True)     # (1, TB)
    logits_t = logits_t + b3_ref[...]
    o_ref[...] = jax.nn.sigmoid(logits_t).astype(o_ref.dtype)


def ids_model_forward(x, params, *, block_batch=512):
    """x: (B, D) float32; params: dict with w1,b1,w2,b2,w3,b3 (f32).

    Returns (B, 1) float32, matching the PyTorch module's forward.
    """
    B, D = x.shape
    w1 = params["w1"].astype(jnp.bfloat16)   # (D, 64)
    w2 = params["w2"].astype(jnp.bfloat16)   # (64, 32)
    b1 = params["b1"]                        # (1, 64)  f32
    b2 = params["b2"]                        # (1, 32)  f32
    w3 = params["w3"]                        # (32, 1)  f32
    b3 = params["b3"]                        # (1, 1)   f32

    # Cast x to bf16 in the wrapper so the HBM->VMEM x stream is half-width.
    xb = x.astype(jnp.bfloat16)

    # Batch tile: multiple of 128 (lane-dense output), >=512 when B allows.
    tb = min(block_batch, _round_up(B, 128))
    padded_b = _round_up(B, tb)
    if padded_b != B:
        xb = jnp.pad(xb, ((0, padded_b - B), (0, 0)))
    num_tiles = padded_b // tb

    # Weights/biases: full-array blocks with a constant index_map -> loaded
    # into VMEM once and kept resident across all batch tiles.
    const_spec = lambda a: pl.BlockSpec(a.shape, lambda i: (0, 0))

    out = pl.pallas_call(
        _ids_mlp_kernel,
        out_shape=jax.ShapeDtypeStruct((1, padded_b), jnp.float32),
        grid_spec=pltpu.PrefetchScalarGridSpec(
            num_scalar_prefetch=0,
            grid=(num_tiles,),
            in_specs=[
                pl.BlockSpec((tb, D), lambda i: (i, 0)),  # x: tiled over batch
                const_spec(w1), const_spec(b1),
                const_spec(w2), const_spec(b2),
                const_spec(w3), const_spec(b3),
            ],
            out_specs=pl.BlockSpec((1, tb), lambda i: (0, i)),        # lane-dense
        ),
        compiler_params=pltpu.CompilerParams(
            dimension_semantics=("parallel",),        # shard batch over TCs
            vmem_limit_bytes=32 * 1024 * 1024,        # safe on v7x's 64 MiB VMEM
        ),
    )(xb, w1, b1, w2, b2, w3, b3)

    return out[0, :B].reshape(B, 1)


def init_params(key, input_dim):
    """Deterministic synthetic parameters (shapes match the nn.Linear layers)."""
    ks = jax.random.split(key, 6)

    def lin(kw, kb, d_in, d_out):
        # Stored as (d_in, d_out) so the kernel computes x @ W + b.
        bound = 1.0 / jnp.sqrt(d_in)
        w = jax.random.uniform(kw, (d_in, d_out), jnp.float32, -bound, bound)
        b = jax.random.uniform(kb, (1, d_out), jnp.float32, -bound, bound)
        return w, b

    w1, b1 = lin(ks[0], ks[1], input_dim, 64)
    w2, b2 = lin(ks[2], ks[3], 64, 32)
    w3, b3 = lin(ks[4], ks[5], 32, 1)
    return dict(w1=w1, b1=b1, w2=w2, b2=b2, w3=w3, b3=b3)


def ids_model_reference(x, params):
    """Pure-JAX f32 reference for the correctness check."""
    h = jnp.maximum(x @ params["w1"] + params["b1"], 0.0)
    h = jnp.maximum(h @ params["w2"] + params["b2"], 0.0)
    return jax.nn.sigmoid(h @ params["w3"] + params["b3"])


if __name__ == "__main__":
    key = jax.random.PRNGKey(0)
    k_param, k_x = jax.random.split(key)

    batch, input_dim = 16, 32
    params = init_params(k_param, input_dim)
    x = jax.random.normal(k_x, (batch, input_dim), jnp.float32)

    out = ids_model_forward(x, params)
    out = jax.block_until_ready(out)

    ref = ids_model_reference(x, params)
    assert out.shape == (batch, 1), f"bad shape {out.shape}"
    # bf16 MXU feeds -> compare against the f32 reference with a loose tolerance.
    assert jnp.allclose(out, ref, atol=2e-2, rtol=2e-2), (
        f"mismatch vs reference, max abs err={float(jnp.max(jnp.abs(out - ref)))}"
    )

    print("KERNEL_OK")
</pallas_src>

<mosaic_0001>
module attributes {stable_mosaic.version = 11 : i64} {
  func.func @_ids_mlp_kernel(%arg0: i32, %arg1: memref<128x32xbf16, #tpu.memory_space<vmem>>, %arg2: memref<32x64xbf16, #tpu.memory_space<vmem>>, %arg3: memref<1x64xf32, #tpu.memory_space<vmem>>, %arg4: memref<64x32xbf16, #tpu.memory_space<vmem>>, %arg5: memref<1x32xf32, #tpu.memory_space<vmem>>, %arg6: memref<32x1xf32, #tpu.memory_space<vmem>>, %arg7: memref<1x1xf32, #tpu.memory_space<vmem>>, %arg8: memref<1x128xf32, #tpu.memory_space<vmem>>) attributes {dimension_semantics = [#tpu.dimension_semantics<parallel>], iteration_bounds = array<i64: 1>, scalar_prefetch = 0 : i64, scratch_operands = 0 : i64, tpu.core_type = #tpu.core_type<tc>, window_params = [{transform_indices = @transform_0, window_bounds = array<i64: 128, 32>}, {pipeline_mode = #tpu.pipeline_mode<synchronous>, transform_indices = @transform_1, window_bounds = array<i64: 32, 64>}, {pipeline_mode = #tpu.pipeline_mode<synchronous>, transform_indices = @transform_2, window_bounds = array<i64: 1, 64>}, {pipeline_mode = #tpu.pipeline_mode<synchronous>, transform_indices = @transform_3, window_bounds = array<i64: 64, 32>}, {pipeline_mode = #tpu.pipeline_mode<synchronous>, transform_indices = @transform_4, window_bounds = array<i64: 1, 32>}, {pipeline_mode = #tpu.pipeline_mode<synchronous>, transform_indices = @transform_5, window_bounds = array<i64: 32, 1>}, {pipeline_mode = #tpu.pipeline_mode<synchronous>, transform_indices = @transform_6, window_bounds = array<i64: 1, 1>}, {transform_indices = @transform_7, window_bounds = array<i64: 1, 128>}]} {
    %c0 = arith.constant 0 : index
    %c0_0 = arith.constant 0 : index
    %0 = vector.load %arg1[%c0, %c0_0] : memref<128x32xbf16, #tpu.memory_space<vmem>>, vector<128x32xbf16>
    %c0_1 = arith.constant 0 : index
    %c0_2 = arith.constant 0 : index
    %1 = vector.load %arg2[%c0_1, %c0_2] : memref<32x64xbf16, #tpu.memory_space<vmem>>, vector<32x64xbf16>
    %cst = arith.constant dense<0.000000e+00> : vector<128x64xf32>
    %2 = tpu.matmul %0, %1, %cst {dimension_numbers = #tpu.dot_dimension_numbers<[1], [0], [0], [1], [0, 0, 1, 1], [], []>} : vector<128x32xbf16>, vector<32x64xbf16>, vector<128x64xf32> -> vector<128x64xf32>
    %c0_3 = arith.constant 0 : index
    %c0_4 = arith.constant 0 : index
    %3 = vector.load %arg3[%c0_3, %c0_4] : memref<1x64xf32, #tpu.memory_space<vmem>>, vector<1x64xf32>
    %4 = vector.broadcast %3 : vector<1x64xf32> to vector<128x64xf32>
    %5 = arith.addf %2, %4 : vector<128x64xf32>
    %cst_5 = arith.constant 0.000000e+00 : f32
    %6 = vector.broadcast %cst_5 : f32 to vector<128x64xf32>
    %7 = arith.maximumf %5, %6 : vector<128x64xf32>
    %8 = arith.truncf %7 : vector<128x64xf32> to vector<128x64xbf16>
    %c0_6 = arith.constant 0 : index
    %c0_7 = arith.constant 0 : index
    %9 = vector.load %arg4[%c0_6, %c0_7] : memref<64x32xbf16, #tpu.memory_space<vmem>>, vector<64x32xbf16>
    %cst_8 = arith.constant dense<0.000000e+00> : vector<128x32xf32>
    %10 = tpu.matmul %8, %9, %cst_8 {dimension_numbers = #tpu.dot_dimension_numbers<[1], [0], [0], [1], [0, 0, 1, 1], [], []>} : vector<128x64xbf16>, vector<64x32xbf16>, vector<128x32xf32> -> vector<128x32xf32>
    %c0_9 = arith.constant 0 : index
    %c0_10 = arith.constant 0 : index
    %11 = vector.load %arg5[%c0_9, %c0_10] : memref<1x32xf32, #tpu.memory_space<vmem>>, vector<1x32xf32>
    %12 = vector.broadcast %11 : vector<1x32xf32> to vector<128x32xf32>
    %13 = arith.addf %10, %12 : vector<128x32xf32>
    %cst_11 = arith.constant 0.000000e+00 : f32
    %14 = vector.broadcast %cst_11 : f32 to vector<128x32xf32>
    %15 = arith.maximumf %13, %14 : vector<128x32xf32>
    %16 = tpu.transpose %15, [1, 0] : vector<128x32xf32> -> vector<32x128xf32>
    %c0_12 = arith.constant 0 : index
    %c0_13 = arith.constant 0 : index
    %17 = vector.load %arg6[%c0_12, %c0_13] : memref<32x1xf32, #tpu.memory_space<vmem>>, vector<32x1xf32>
    %18 = vector.broadcast %17 : vector<32x1xf32> to vector<32x128xf32>
    %19 = arith.mulf %16, %18 : vector<32x128xf32>
    %cst_14 = arith.constant dense<0.000000e+00> : vector<128xf32>
    %20 = vector.multi_reduction <add>, %19, %cst_14 [0] : vector<32x128xf32> to vector<128xf32>
    %21 = vector.shape_cast %20 : vector<128xf32> to vector<1x128xf32>
    %c0_15 = arith.constant 0 : index
    %c0_16 = arith.constant 0 : index
    %22 = vector.load %arg7[%c0_15, %c0_16] : memref<1x1xf32, #tpu.memory_space<vmem>>, vector<1x1xf32>
    %23 = vector.broadcast %22 : vector<1x1xf32> to vector<1x128xf32>
    %24 = arith.addf %21, %23 : vector<1x128xf32>
    %25 = arith.negf %24 : vector<1x128xf32>
    %26 = math.exp %25 : vector<1x128xf32>
    %cst_17 = arith.constant 1.000000e+00 : f32
    %27 = vector.broadcast %cst_17 : f32 to vector<1x128xf32>
    %28 = arith.addf %27, %26 : vector<1x128xf32>
    %29 = arith.divf %27, %28 : vector<1x128xf32>
    %c0_18 = arith.constant 0 : index
    %c0_19 = arith.constant 0 : index
    %30 = vector.load %arg8[%c0_18, %c0_19] : memref<1x128xf32, #tpu.memory_space<vmem>>, vector<1x128xf32>
    tpu.vector_store %arg8[%c0_18, %c0_19], %29 {strides = array<i32>} : memref<1x128xf32, #tpu.memory_space<vmem>>, vector<1x128xf32>,
    return
  }
  func.func @transform_0(%arg0: i32) -> (i32, i32) {
    %c0_i32 = arith.constant 0 : i32
    %c0_i32_0 = arith.constant 0 : i32
    return %arg0, %c0_i32 : i32, i32
  }
  func.func @transform_1(%arg0: i32) -> (i32, i32) {
    %c0_i32 = arith.constant 0 : i32
    %c0_i32_0 = arith.constant 0 : i32
    %c0_i32_1 = arith.constant 0 : i32
    return %c0_i32, %c0_i32_0 : i32, i32
  }
  func.func @transform_2(%arg0: i32) -> (i32, i32) {
    %c0_i32 = arith.constant 0 : i32
    %c0_i32_0 = arith.constant 0 : i32
    %c0_i32_1 = arith.constant 0 : i32
    return %c0_i32, %c0_i32_0 : i32, i32
  }
  func.func @transform_3(%arg0: i32) -> (i32, i32) {
    %c0_i32 = arith.constant 0 : i32
    %c0_i32_0 = arith.constant 0 : i32
    %c0_i32_1 = arith.constant 0 : i32
    return %c0_i32, %c0_i32_0 : i32, i32
  }
  func.func @transform_4(%arg0: i32) -> (i32, i32) {
    %c0_i32 = arith.constant 0 : i32
    %c0_i32_0 = arith.constant 0 : i32
    %c0_i32_1 = arith.constant 0 : i32
    return %c0_i32, %c0_i32_0 : i32, i32
  }
  func.func @transform_5(%arg0: i32) -> (i32, i32) {
    %c0_i32 = arith.constant 0 : i32
    %c0_i32_0 = arith.constant 0 : i32
    %c0_i32_1 = arith.constant 0 : i32
    return %c0_i32, %c0_i32_0 : i32, i32
  }
  func.func @transform_6(%arg0: i32) -> (i32, i32) {
    %c0_i32 = arith.constant 0 : i32
    %c0_i32_0 = arith.constant 0 : i32
    %c0_i32_1 = arith.constant 0 : i32
    return %c0_i32, %c0_i32_0 : i32, i32
  }
  func.func @transform_7(%arg0: i32) -> (i32, i32) {
    %c0_i32 = arith.constant 0 : i32
    %c0_i32_0 = arith.constant 0 : i32
    return %c0_i32, %arg0 : i32, i32
  }
}

</mosaic_0001>

<llo_original>
// kernel: tpu_custom_call.1
$region0: #{tpu_custom_call.1}
  #allocation0 [shape = 'u32[]', space=smem, size = 0x4, offset = 0x4, fixed_abs, tag = 'smem constant byte address 0x4 - core index']
  #allocation1 [shape = 'u32[144,128]{1,0:T(1,128)}', space=vmem, size = 0x12000, scoped, tag = 'internal scratch']
  #allocation2 [shape = 'f32[1,1]{1,0:T(1,128)S(1)}', space=vmem, size = 0x200, scoped, tag = 'scoped memory for tpu_custom_call.1']
  %s0 = inlined_call_operand.vmem [shape: bf16[128,32], index: 0, kind: input, shape index: {}]
  %s1 = inlined_call_operand.vmem [shape: bf16[32,64], index: 1, kind: input, shape index: {}]
  %s2 = inlined_call_operand.vmem [shape: f32[1,64], index: 2, kind: input, shape index: {}]
  %s3 = inlined_call_operand.vmem [shape: bf16[64,32], index: 3, kind: input, shape index: {}]
  %s4 = inlined_call_operand.vmem [shape: f32[1,32], index: 4, kind: input, shape index: {}]
  %s5 = inlined_call_operand.vmem [shape: f32[32,1], index: 5, kind: input, shape index: {}]
  %s6 = inlined_call_operand.<no memory space> [shape: f32[1,1], index: 6, kind: input, shape index: {}]
  %s7 = inlined_call_operand.hbm [shape: f32[1,128], index: 7, kind: output, shape index: {}]
  %s8 = sld [smem:[#allocation0]]
  $region38: #{tpu_custom_call.1} parent=0
    _
  %s10 = ssub.s32 1, %s8
  %s11 = scalar_select 0, %s10, %s8
  %v12 = vstv %s6
  %13 = vst [vmem:[#allocation2] sm:$0x1] %v12
  $region1: #{tpu_custom_call.1} parent=0
    #allocation3 [shape = 'u8[512]{0}', space=vmem, size = 0x400, scoped, tag = 'output window, operand 0, single buffered']
    #allocation4 [shape = 's32[1]{0}', space=sflag, size = 0x4, scoped, tag = 'scoped memory for tpu_custom_call.1']
    %14 = vsyncpa [#allocation4], 0
    // Predicated region
    $region2: #{tpu_custom_call.1} parent=1 // pred_check
      _
    $region3: #{tpu_custom_call.1} parent=1 // pred_check_branch
      %16 = sbr.rel (0) target = $region5
    $region4: #{tpu_custom_call.1} parent=1 // pred_region
      _
    $region5: #{tpu_custom_call.1} parent=1 // pred_fallthru
      _
    // Predicated region
    $region6: #{tpu_custom_call.1} parent=1 // pred_check
      _
    $region7: #{tpu_custom_call.1} parent=1 // pred_check_branch
      %18 = sbr.rel (0) target = $region9
    $region8: #{tpu_custom_call.1} parent=1 // pred_region
      _
    $region9: #{tpu_custom_call.1} parent=1 // pred_fallthru
      _
    // Predicated region
    $region10: #{tpu_custom_call.1} parent=1 // pred_check
      _
    $region11: #{tpu_custom_call.1} parent=1 // pred_check_branch
      %20 = sbr.rel (0) target = $region13
    $region12: #{tpu_custom_call.1} parent=1 // pred_region
      _
    $region13: #{tpu_custom_call.1} parent=1 // pred_fallthru
      _
    // Predicated region
    $region14: #{tpu_custom_call.1} parent=1 // pred_check
      _
    $region15: #{tpu_custom_call.1} parent=1 // pred_check_branch
      %22 = sbr.rel (0) target = $region17
    $region16: #{tpu_custom_call.1} parent=1 // pred_region
      _
    $region17: #{tpu_custom_call.1} parent=1 // pred_fallthru
      _
    // Predicated region
    $region18: #{tpu_custom_call.1} parent=1 // pred_check
      _
    $region19: #{tpu_custom_call.1} parent=1 // pred_check_branch
      %24 = sbr.rel (0) target = $region21
    $region20: #{tpu_custom_call.1} parent=1 // pred_region
      _
    $region21: #{tpu_custom_call.1} parent=1 // pred_fallthru
      _
    // Predicated region
    $region22: #{tpu_custom_call.1} parent=1 // pred_check
      _
    $region23: #{tpu_custom_call.1} parent=1 // pred_check_branch
      %26 = sbr.rel (0) target = $region25
    $region24: #{tpu_custom_call.1} parent=1 // pred_region
      _
    $region25: #{tpu_custom_call.1} parent=1 // pred_fallthru
      _
    // Predicated region
    $region26: #{tpu_custom_call.1} parent=1 // pred_check
      _
    $region27: #{tpu_custom_call.1} parent=1 // pred_check_branch
      %28 = sbr.rel (0) target = $region29
    $region28: #{tpu_custom_call.1} parent=1 // pred_region
      _
    $region29: #{tpu_custom_call.1} parent=1 // pred_fallthru
      _
    %v30 = vld [vmem:[%s0] sm:$0xf]
    %v31 = vld [vmem:[%s0 + $0x4] sm:$0xf]
    %v32 = vld [vmem:[%s0 + $0x8] sm:$0xf]
    %v33 = vld [vmem:[%s0 + $0xc] sm:$0xf]
    %v34 = vld [vmem:[%s0 + $0x10] sm:$0xf]
    %v35 = vld [vmem:[%s0 + $0x14] sm:$0xf]
    %v36 = vld [vmem:[%s0 + $0x18] sm:$0xf]
    %v37 = vld [vmem:[%s0 + $0x1c] sm:$0xf]
    %v38 = vld [vmem:[%s0 + $0x20] sm:$0xf]
    %v39 = vld [vmem:[%s0 + $0x24] sm:$0xf]
    %v40 = vld [vmem:[%s0 + $0x28] sm:$0xf]
    %v41 = vld [vmem:[%s0 + $0x2c] sm:$0xf]
    %v42 = vld [vmem:[%s0 + $0x30] sm:$0xf]
    %v43 = vld [vmem:[%s0 + $0x34] sm:$0xf]
    %v44 = vld [vmem:[%s0 + $0x38] sm:$0xf]
    %v45 = vld [vmem:[%s0 + $0x3c] sm:$0xf]
    %v46 = vld [vmem:[%s1] sm:$0xf]
    %v47 = vld [vmem:[%s1 + $0x4] sm:$0xf]
    %v48 = vld [vmem:[%s1 + $0x8] sm:$0xf]
    %v49 = vld [vmem:[%s1 + $0xc] sm:$0xf]
    %v50 = vld [vmem:[%s2] sm:$0x1]
    %v52 = vlaneseq
    %v53 = vshrl.u32 %v52, 7
    %v54 = vsub.s32 0, %v53
    %v55 = vrot.slane %v50, %v54
    %v73 = vunpack.c.l.b16 %v30
    %v74 = vunpack.c.l.b16 %v31
    %v75 = vunpack.c.l.b16 %v32
    %v76 = vunpack.c.l.b16 %v33
    %v77 = vunpack.c.l.b16 %v34
    %v78 = vunpack.c.l.b16 %v35
    %v79 = vunpack.c.l.b16 %v36
    %v80 = vunpack.c.l.b16 %v37
    %v81 = vunpack.c.l.b16 %v38
    %v82 = vunpack.c.l.b16 %v39
    %v83 = vunpack.c.l.b16 %v40
    %v84 = vunpack.c.l.b16 %v41
    %v85 = vunpack.c.l.b16 %v42
    %v86 = vunpack.c.l.b16 %v43
    %v87 = vunpack.c.l.b16 %v44
    %v88 = vunpack.c.l.b16 %v45
    %v89 = vpack.c.b16 %v74, %v73
    %v90 = vpack.c.b16 %v76, %v75
    %v91 = vpack.c.b16 %v78, %v77
    %v92 = vpack.c.b16 %v80, %v79
    %v93 = vpack.c.b16 %v82, %v81
    %v94 = vpack.c.b16 %v84, %v83
    %v95 = vpack.c.b16 %v86, %v85
    %v96 = vpack.c.b16 %v88, %v87
    %v101 = vunpack.c.l.b16 %v46
    %v102 = vunpack.c.l.b16 %v47
    %v103 = vunpack.c.l.b16 %v48
    %v104 = vunpack.c.l.b16 %v49
    %v105 = vpack.c.b16 %v102, %v101
    %v106 = vpack.c.b16 %v104, %v103
    %vm109 = vcmask 261120
    %v111 = vsel %vm109, %v89, 0
    %v114 = vsel %vm109, %v90, 0
    %v117 = vsel %vm109, %v91, 0
    %v120 = vsel %vm109, %v92, 0
    %v123 = vsel %vm109, %v93, 0
    %v126 = vsel %vm109, %v94, 0
    %v129 = vsel %vm109, %v95, 0
    %v132 = vsel %vm109, %v96, 0
    %134 = vmatprep.subr.bf16.mxu0 0
    %135 = vmatpush1.bf16.msra.mxu0 %v105
    %136 = vmatprep.subr.bf16.mxu0 0
    %137 = vmatpush1.bf16.msra.mxu0 %v106
    %138 = vmatprep.subr.bf16.mxu0 0
    %139 = vmatpush1.bf16.msra.mxu0 0
    %140 = vmatprep.subr.bf16.mxu0 0
    %141 = vmatpush1.bf16.msra.mxu0 0
    %142 = vmatprep.subr.bf16.mxu0 0
    %143 = vmatpush1.bf16.msra.mxu0 0
    %144 = vmatprep.subr.bf16.mxu0 0
    %145 = vmatpush1.bf16.msra.mxu0 0
    %146 = vmatprep.subr.bf16.mxu0 0
    %147 = vmatpush1.bf16.msra.mxu0 0
    %148 = vmatprep.subr.bf16.mxu0 0
    %149 = vmatpush1.bf16.msra.mxu0 0
    %150 = vmatprep.subr.bf16.mxu0 0
    %151 = vmatpush1.bf16.msra.mxu0 0
    %152 = vmatprep.subr.bf16.mxu0 0
    %153 = vmatpush1.bf16.msra.mxu0 0
    %154 = vmatprep.subr.bf16.mxu0 0
    %155 = vmatpush1.bf16.msra.mxu0 0
    %156 = vmatprep.subr.bf16.mxu0 0
    %157 = vmatpush1.bf16.msra.mxu0 0
    %158 = vmatprep.subr.bf16.mxu0 0
    %159 = vmatpush1.bf16.msra.mxu0 0
    %160 = vmatprep.subr.bf16.mxu0 0
    %161 = vmatpush1.bf16.msra.mxu0 0
    %162 = vmatprep.subr.bf16.mxu0 0
    %163 = vmatpush1.bf16.msra.mxu0 0
    %164 = vmatprep.subr.bf16.mxu0 0
    %165 = vmatpush1.bf16.msra.mxu0 0
    %166 = vmatprep.mubr.bf16.mxu0 0
    %167 = vmatmul.mubr.bf16.gmra.mrb[0].mxu0 %v111
    %v168 = vpop.f32.mrb[0].mxu0
    %v169 = vadd.f32 %v55, %v168
    %v170 = vpop.f32.mrb[0].mxu0
    %v171 = vpop.f32.mrb[0].mxu0
    %v172 = vadd.f32 %v55, %v171
    %v173 = vpop.f32.mrb[0].mxu0
    %174 = vmatprep.mubr.bf16.mxu0 0
    %175 = vmatmul.mubr.bf16.gmra.mrb[0].mxu0 %v114
    %v176 = vpop.f32.mrb[0].mxu0
    %v177 = vadd.f32 %v55, %v176
    %v178 = vpop.f32.mrb[0].mxu0
    %v179 = vpop.f32.mrb[0].mxu0
    %v180 = vadd.f32 %v55, %v179
    %v181 = vpop.f32.mrb[0].mxu0
    %182 = vmatprep.mubr.bf16.mxu0 0
    %183 = vmatmul.mubr.bf16.gmra.mrb[0].mxu0 %v117
    %v184 = vpop.f32.mrb[0].mxu0
    %v185 = vadd.f32 %v55, %v184
    %v186 = vpop.f32.mrb[0].mxu0
    %v187 = vpop.f32.mrb[0].mxu0
    %v188 = vadd.f32 %v55, %v187
    %v189 = vpop.f32.mrb[0].mxu0
    %190 = vmatprep.mubr.bf16.mxu0 0
    %191 = vmatmul.mubr.bf16.gmra.mrb[0].mxu0 %v120
    %v192 = vpop.f32.mrb[0].mxu0
    %v193 = vadd.f32 %v55, %v192
    %v194 = vpop.f32.mrb[0].mxu0
    %v195 = vpop.f32.mrb[0].mxu0
    %v196 = vadd.f32 %v55, %v195
    %v197 = vpop.f32.mrb[0].mxu0
    %198 = vmatprep.mubr.bf16.mxu0 0
    %199 = vmatmul.mubr.bf16.gmra.mrb[0].mxu0 %v123
    %v200 = vpop.f32.mrb[0].mxu0
    %v201 = vadd.f32 %v55, %v200
    %v202 = vpop.f32.mrb[0].mxu0
    %v203 = vpop.f32.mrb[0].mxu0
    %v204 = vadd.f32 %v55, %v203
    %v205 = vpop.f32.mrb[0].mxu0
    %206 = vmatprep.mubr.bf16.mxu0 0
    %207 = vmatmul.mubr.bf16.gmra.mrb[0].mxu0 %v126
    %v208 = vpop.f32.mrb[0].mxu0
    %v209 = vadd.f32 %v55, %v208
    %v210 = vpop.f32.mrb[0].mxu0
    %v211 = vpop.f32.mrb[0].mxu0
    %v212 = vadd.f32 %v55, %v211
    %v213 = vpop.f32.mrb[0].mxu0
    %214 = vmatprep.mubr.bf16.mxu0 0
    %215 = vmatmul.mubr.bf16.gmra.mrb[0].mxu0 %v129
    %v216 = vpop.f32.mrb[0].mxu0
    %v217 = vadd.f32 %v55, %v216
    %v218 = vpop.f32.mrb[0].mxu0
    %v219 = vpop.f32.mrb[0].mxu0
    %v220 = vadd.f32 %v55, %v219
    %v221 = vpop.f32.mrb[0].mxu0
    %222 = vmatprep.mubr.bf16.mxu0 0
    %223 = vmatmul.mubr.bf16.gmra.mrb[0].mxu0 %v132
    %v224 = vpop.f32.mrb[0].mxu0
    %v225 = vadd.f32 %v55, %v224
    %v226 = vpop.f32.mrb[0].mxu0
    %v227 = vpop.f32.mrb[0].mxu0
    %v228 = vadd.f32 %v55, %v227
    %v229 = vpop.f32.mrb[0].mxu0
    %230 = vdwg.mxu0
    %v231 = vmax.f32 %v169, 0.0
    %v232 = vmax.f32 %v172, 0.0
    %v233 = vmax.f32 %v177, 0.0
    %v234 = vmax.f32 %v180, 0.0
    %v235 = vmax.f32 %v185, 0.0
    %v236 = vmax.f32 %v188, 0.0
    %v237 = vmax.f32 %v193, 0.0
    %v238 = vmax.f32 %v196, 0.0
    %v239 = vmax.f32 %v201, 0.0
    %v240 = vmax.f32 %v204, 0.0
    %v241 = vmax.f32 %v209, 0.0
    %v242 = vmax.f32 %v212, 0.0
    %v243 = vmax.f32 %v217, 0.0
    %v244 = vmax.f32 %v220, 0.0
    %v245 = vmax.f32 %v225, 0.0
    %v246 = vmax.f32 %v228, 0.0
    %v247 = vpack.c.bf16 %v232, %v231
    %v248 = vpack.c.bf16 %v234, %v233
    %v249 = vpack.c.bf16 %v236, %v235
    %v250 = vpack.c.bf16 %v238, %v237
    %v251 = vpack.c.bf16 %v240, %v239
    %v252 = vpack.c.bf16 %v242, %v241
    %v253 = vpack.c.bf16 %v244, %v243
    %v254 = vpack.c.bf16 %v246, %v245
    %v255 = vld [vmem:[%s3] sm:$0xf]
    %v256 = vld [vmem:[%s3 + $0x4] sm:$0xf]
    %v257 = vld [vmem:[%s3 + $0x8] sm:$0xf]
    %v258 = vld [vmem:[%s3 + $0xc] sm:$0xf]
    %v259 = vld [vmem:[%s3 + $0x10] sm:$0xf]
    %v260 = vld [vmem:[%s3 + $0x14] sm:$0xf]
    %v261 = vld [vmem:[%s3 + $0x18] sm:$0xf]
    %v262 = vld [vmem:[%s3 + $0x1c] sm:$0xf]
    %v263 = vld [vmem:[%s4] sm:$0x1]
    %v265 = vlaneseq
    %v266 = vshrl.u32 %v265, 7
    %v267 = vsub.s32 0, %v266
    %v268 = vrot.slane %v263, %v267
    %v278 = vunpack.c.l.b16 %v255
    %v279 = vunpack.c.l.b16 %v256
    %v280 = vunpack.c.l.b16 %v257
    %v281 = vunpack.c.l.b16 %v258
    %v282 = vunpack.c.l.b16 %v259
    %v283 = vunpack.c.l.b16 %v260
    %v284 = vunpack.c.l.b16 %v261
    %v285 = vunpack.c.l.b16 %v262
    %v286 = vpack.c.b16 %v279, %v278
    %v287 = vpack.c.b16 %v281, %v280
    %v288 = vpack.c.b16 %v283, %v282
    %v289 = vpack.c.b16 %v285, %v284
    %vm294 = vcmask 523264
    %v296 = vsel %vm294, %v247, 0
    %v299 = vsel %vm294, %v248, 0
    %v302 = vsel %vm294, %v249, 0
    %v305 = vsel %vm294, %v250, 0
    %v308 = vsel %vm294, %v251, 0
    %v311 = vsel %vm294, %v252, 0
    %v314 = vsel %vm294, %v253, 0
    %v317 = vsel %vm294, %v254, 0
    %319 = vmatprep.subr.bf16.mxu0 0
    %320 = vmatpush1.bf16.msra.mxu0 %v286
    %321 = vmatprep.subr.bf16.mxu0 0
    %322 = vmatpush1.bf16.msra.mxu0 %v287
    %323 = vmatprep.subr.bf16.mxu0 0
    %324 = vmatpush1.bf16.msra.mxu0 %v288
    %325 = vmatprep.subr.bf16.mxu0 0
    %326 = vmatpush1.bf16.msra.mxu0 %v289
    %327 = vmatprep.subr.bf16.mxu0 0
    %328 = vmatpush1.bf16.msra.mxu0 0
    %329 = vmatprep.subr.bf16.mxu0 0
    %330 = vmatpush1.bf16.msra.mxu0 0
    %331 = vmatprep.subr.bf16.mxu0 0
    %332 = vmatpush1.bf16.msra.mxu0 0
    %333 = vmatprep.subr.bf16.mxu0 0
    %334 = vmatpush1.bf16.msra.mxu0 0
    %335 = vmatprep.subr.bf16.mxu0 0
    %336 = vmatpush1.bf16.msra.mxu0 0
    %337 = vmatprep.subr.bf16.mxu0 0
    %338 = vmatpush1.bf16.msra.mxu0 0
    %339 = vmatprep.subr.bf16.mxu0 0
    %340 = vmatpush1.bf16.msra.mxu0 0
    %341 = vmatprep.subr.bf16.mxu0 0
    %342 = vmatpush1.bf16.msra.mxu0 0
    %343 = vmatprep.subr.bf16.mxu0 0
    %344 = vmatpush1.bf16.msra.mxu0 0
    %345 = vmatprep.subr.bf16.mxu0 0
    %346 = vmatpush1.bf16.msra.mxu0 0
    %347 = vmatprep.subr.bf16.mxu0 0
    %348 = vmatpush1.bf16.msra.mxu0 0
    %349 = vmatprep.subr.bf16.mxu0 0
    %350 = vmatpush1.bf16.msra.mxu0 0
    %351 = vmatprep.mubr.bf16.mxu0 0
    %352 = vmatmul.mubr.bf16.gmra.mrb[0].mxu0 %v296
    %v353 = vpop.f32.mrb[0].mxu0
    %v354 = vadd.f32 %v268, %v353
    %v355 = vpop.f32.mrb[0].mxu0
    %v356 = vpop.f32.mrb[0].mxu0
    %v357 = vadd.f32 %v268, %v356
    %v358 = vpop.f32.mrb[0].mxu0
    %359 = vmatprep.mubr.bf16.mxu0 0
    %360 = vmatmul.mubr.bf16.gmra.mrb[0].mxu0 %v299
    %v361 = vpop.f32.mrb[0].mxu0
    %v362 = vadd.f32 %v268, %v361
    %v363 = vpop.f32.mrb[0].mxu0
    %v364 = vpop.f32.mrb[0].mxu0
    %v365 = vadd.f32 %v268, %v364
    %v366 = vpop.f32.mrb[0].mxu0
    %367 = vmatprep.mubr.bf16.mxu0 0
    %368 = vmatmul.mubr.bf16.gmra.mrb[0].mxu0 %v302
    %v369 = vpop.f32.mrb[0].mxu0
    %v370 = vadd.f32 %v268, %v369
    %v371 = vpop.f32.mrb[0].mxu0
    %v372 = vpop.f32.mrb[0].mxu0
    %v373 = vadd.f32 %v268, %v372
    %v374 = vpop.f32.mrb[0].mxu0
    %375 = vmatprep.mubr.bf16.mxu0 0
    %376 = vmatmul.mubr.bf16.gmra.mrb[0].mxu0 %v305
    %v377 = vpop.f32.mrb[0].mxu0
    %v378 = vadd.f32 %v268, %v377
    %v379 = vpop.f32.mrb[0].mxu0
    %v380 = vpop.f32.mrb[0].mxu0
    %v381 = vadd.f32 %v268, %v380
    %v382 = vpop.f32.mrb[0].mxu0
    %383 = vmatprep.mubr.bf16.mxu0 0
    %384 = vmatmul.mubr.bf16.gmra.mrb[0].mxu0 %v308
    %v385 = vpop.f32.mrb[0].mxu0
    %v386 = vadd.f32 %v268, %v385
    %v387 = vpop.f32.mrb[0].mxu0
    %v388 = vpop.f32.mrb[0].mxu0
    %v389 = vadd.f32 %v268, %v388
    %v390 = vpop.f32.mrb[0].mxu0
    %391 = vmatprep.mubr.bf16.mxu0 0
    %392 = vmatmul.mubr.bf16.gmra.mrb[0].mxu0 %v311
    %v393 = vpop.f32.mrb[0].mxu0
    %v394 = vadd.f32 %v268, %v393
    %v395 = vpop.f32.mrb[0].mxu0
    %v396 = vpop.f32.mrb[0].mxu0
    %v397 = vadd.f32 %v268, %v396
    %v398 = vpop.f32.mrb[0].mxu0
    %399 = vmatprep.mubr.bf16.mxu0 0
    %400 = vmatmul.mubr.bf16.gmra.mrb[0].mxu0 %v314
    %v401 = vpop.f32.mrb[0].mxu0
    %v402 = vadd.f32 %v268, %v401
    %v403 = vpop.f32.mrb[0].mxu0
    %v404 = vpop.f32.mrb[0].mxu0
    %v405 = vadd.f32 %v268, %v404
    %v406 = vpop.f32.mrb[0].mxu0
    %407 = vmatprep.mubr.bf16.mxu0 0
    %408 = vmatmul.mubr.bf16.gmra.mrb[0].mxu0 %v317
    %v409 = vpop.f32.mrb[0].mxu0
    %v410 = vadd.f32 %v268, %v409
    %v411 = vpop.f32.mrb[0].mxu0
    %v412 = vpop.f32.mrb[0].mxu0
    %v413 = vadd.f32 %v268, %v412
    %v414 = vpop.f32.mrb[0].mxu0
    %415 = vdwg.mxu0
    %v416 = vmax.f32 %v354, 0.0
    %v417 = vmax.f32 %v357, 0.0
    %v418 = vmax.f32 %v362, 0.0
    %v419 = vmax.f32 %v365, 0.0
    %v420 = vmax.f32 %v370, 0.0
    %v421 = vmax.f32 %v373, 0.0
    %v422 = vmax.f32 %v378, 0.0
    %v423 = vmax.f32 %v381, 0.0
    %v424 = vmax.f32 %v386, 0.0
    %v425 = vmax.f32 %v389, 0.0
    %v426 = vmax.f32 %v394, 0.0
    %v427 = vmax.f32 %v397, 0.0
    %v428 = vmax.f32 %v402, 0.0
    %v429 = vmax.f32 %v405, 0.0
    %v430 = vmax.f32 %v410, 0.0
    %v431 = vmax.f32 %v413, 0.0
    %432 = vxpose.xlu0.b32.start [1/16] %v416, 128
    %433 = vxpose.xlu0.b32.cont [2/16] %v417, 128
    %434 = vxpose.xlu0.b32.cont [3/16] %v418, 128
    %435 = vxpose.xlu0.b32.cont [4/16] %v419, 128
    %436 = vxpose.xlu0.b32.cont [5/16] %v420, 128
    %437 = vxpose.xlu0.b32.cont [6/16] %v421, 128
    %438 = vxpose.xlu0.b32.cont [7/16] %v422, 128
    %439 = vxpose.xlu0.b32.cont [8/16] %v423, 128
    %440 = vxpose.xlu0.b32.cont [9/16] %v424, 128
    %441 = vxpose.xlu0.b32.cont [10/16] %v425, 128
    %442 = vxpose.xlu0.b32.cont [11/16] %v426, 128
    %443 = vxpose.xlu0.b32.cont [12/16] %v427, 128
    %444 = vxpose.xlu0.b32.cont [13/16] %v428, 128
    %445 = vxpose.xlu0.b32.cont [14/16] %v429, 128
    %446 = vxpose.xlu0.b32.cont [15/16] %v430, 128
    %447 = vxpose.xlu0.b32.end [16/16] %v431, 128
    %v448 = vpop.trf.xlu0
    %v449 = vpop.trf.xlu0
    %v450 = vpop.trf.xlu0
    %v451 = vpop.trf.xlu0
    %v452 = vpop.trf.xlu0
    %v453 = vpop.trf.xlu0
    %v454 = vpop.trf.xlu0
    %v455 = vpop.trf.xlu0
    %v456 = vpop.trf.xlu0
    %v457 = vpop.trf.xlu0
    %v458 = vpop.trf.xlu0
    %v459 = vpop.trf.xlu0
    %v460 = vpop.trf.xlu0
    %v461 = vpop.trf.xlu0
    %v462 = vpop.trf.xlu0
    %v463 = vpop.trf.xlu0
    %v464 = vld [vmem:[%s5] sm:$0xff]
    %v465 = vld [vmem:[%s5 + $0x8] sm:$0xff]
    %v466 = vld [vmem:[%s5 + $0x10] sm:$0xff]
    %v467 = vld [vmem:[%s5 + $0x18] sm:$0xff]
    %469 = vset.pattern.permute.xlu0 0
    %470 = vperm.xlu0 %469, %v464
    %v471 = vpop.permute.xlu0 %470
    %474 = vset.pattern.permute.xlu0 0
    %475 = vperm.xlu0 %474, %v465
    %v476 = vpop.permute.xlu0 %475
    %479 = vset.pattern.permute.xlu0 0
    %480 = vperm.xlu0 %479, %v466
    %v481 = vpop.permute.xlu0 %480
    %484 = vset.pattern.permute.xlu0 0
    %485 = vperm.xlu0 %484, %v467
    %v486 = vpop.permute.xlu0 %485
    %v488 = vmul.f32 %v448, %v471
    %v489 = vmul.f32 %v449, %v476
    %v490 = vmul.f32 %v450, %v481
    %v491 = vmul.f32 %v451, %v486
    %v492 = vadd.f32 %v488, %v489
    %v493 = vadd.f32 %v492, %v490
    %v494 = vadd.f32 %v493, %v491
    %v495 = vrot.slane %v494, 4
    %v496 = vadd.f32 %v494, %v495
    %v497 = vrot.slane %v496, 2
    %v498 = vadd.f32 %v496, %v497
    %v499 = vrot.slane %v498, 1
    %v500 = vadd.f32 %v498, %v499
    %v501 = vld [vmem:[#allocation2] sm:$0x1]
    %503 = vset.pattern.permute.xlu0 0
    %504 = vperm.xlu0 %503, %v501
    %v505 = vpop.permute.xlu0 %504
    %v507 = vlaneseq
    %v508 = vshrl.u32 %v507, 7
    %v509 = vsub.s32 0, %v508
    %v510 = vrot.slane %v505, %v509
    %v511 = vadd.f32 %v500, %v510
    %v512 = vxor.u32 %v511, 2147483648
    %v513 = vmul.f32 %v512, 1.442695
    %v514 = vpow.pop %v513
    %v515 = vadd.f32 %v514, 1.0
    %v516 = vrcp.pop %v515
    %v517 = vmul.f32 1.0, %v516
    %518 = vst [vmem:[#allocation3] sm:$0x1] %v517
    // Predicated region
    $region30: #{tpu_custom_call.1} parent=1 // pred_check
      _
    $region31: #{tpu_custom_call.1} parent=1 // pred_check_branch
      %520 = sbr.rel (0) target = $region33
    $region32: #{tpu_custom_call.1} parent=1 // pred_region
      %s522 = ssub.s32 16, 16
      %523 = vsyncadd [#allocation4], %s522
      %s525 = sshll.u32 [#allocation3], 4
      %s526 = int_to_ptr.vmem [resolvable:$true] %s525
      %528 = dma.vmem_to_hbm [thread:$0]  %s526, 16, %s7, [#allocation4]
    $region33: #{tpu_custom_call.1} parent=1 // pred_fallthru
      _
    // Predicated region
    $region34: #{tpu_custom_call.1} parent=1 // pred_check
      _
    $region35: #{tpu_custom_call.1} parent=1 // pred_check_branch
      %530 = sbr.rel (0) target = $region37
    $region36: #{tpu_custom_call.1} parent=1 // pred_region
      %531 = dma.done [#allocation4], 16
    $region37: #{tpu_custom_call.1} parent=1 // pred_fallthru
      _
    %532 = vsyncpa [#allocation4], 1

</llo_original>
